<compile_context>
chip_gen: v5e
topology: v5e:2x2
jax: 0.10.0
libtpu: 0.0.40
codegen_flags: <defaults>
</compile_context>

<pallas_src>
import functools

import jax
import jax.numpy as jnp
from jax import lax
from jax.experimental import pallas as pl
from jax.experimental.pallas import tpu as pltpu


def _soft_ce_kernel(x_ref, t_ref, o_ref, *, n_rows, n_classes, tile_n,
                    needs_row_mask, needs_lane_mask, assume_normalized_targets):
    """One (tile_n, c_block) block of logits + soft targets -> one partial-sum block."""
    x = x_ref[...]                                   # native dtype (f32 / bf16 / f16)
    t = t_ref[...]

    lane_valid = None
    if needs_lane_mask:
        # Class axis was padded up to a lane multiple; padded lanes hold garbage.
        col = lax.broadcasted_iota(jnp.int32, x.shape, 1)
        lane_valid = col < n_classes
        x = jnp.where(lane_valid, x, jnp.array(-jnp.inf, dtype=x.dtype))
        t = jnp.where(lane_valid, t, jnp.array(0, dtype=t.dtype))

    # Numerically stable log_softmax pieces along the lane (class) axis.
    # Row max on the native dtype (exact), casts happen lazily below.
    m = jnp.max(x, axis=-1, keepdims=True).astype(jnp.float32)      # (tile_n, 1)
    shifted = x.astype(jnp.float32) - m                             # (tile_n, C) f32, <= 0
    lse = jnp.log(jnp.sum(jnp.exp(shifted), axis=-1, keepdims=True))

    t32 = t.astype(jnp.float32)
    dot_term = t32 * shifted
    if needs_lane_mask:
        # Padded lanes: 0 * (-inf) == NaN; discard them explicitly.
        dot_term = jnp.where(lane_valid, dot_term, 0.0)
    t_dot = jnp.sum(dot_term, axis=-1, keepdims=True)               # (tile_n, 1)

    if assume_normalized_targets:
        per_row = lse - t_dot                                       # sum(t) == 1
    else:
        t_sum = jnp.sum(t32, axis=-1, keepdims=True)
        per_row = t_sum * lse - t_dot                               # == sum(-t * logp)

    if needs_row_mask:
        # Only the per-row result is masked (O(tile_n)); garbage/NaN in padded rows
        # cannot leak across rows because every reduction above is per-row.
        i = pl.program_id(0)
        row_ids = lax.broadcasted_iota(jnp.int32, (tile_n, 1), 0)
        valid = row_ids < (n_rows - i * tile_n)
        per_row = jnp.where(valid, per_row, 0.0)

    tile_sum = jnp.sum(per_row)                                     # scalar
    o_ref[...] = jnp.full(o_ref.shape, tile_sum, dtype=jnp.float32)


def soft_target_cross_entropy(x, target, *, assume_normalized_targets=False):
    """Pallas implementation of timm SoftTargetCrossEntropy forward (returns a scalar)."""
    N, C = x.shape
    assert target.shape == (N, C)

    x_item = jnp.dtype(x.dtype).itemsize
    t_item = jnp.dtype(target.dtype).itemsize
    itemsize = max(x_item, t_item)
    # Sublane-packing multiple: 8 for 32-bit, 16 for 16-bit, 32 for 8-bit dtypes.
    mult = 8 if itemsize >= 4 else (16 if itemsize == 2 else 32)

    # Pad the class (lane) axis of the block to a multiple of 128; mask inside the kernel.
    c_block = ((C + 127) // 128) * 128
    needs_lane_mask = c_block != C

    # Generation-aware VMEM sizing: ~96 MiB limit on v5e/v6e (128 MiB VMEM),
    # ~48 MiB on v7x (64 MiB per TensorCore); keep ~20% headroom for compiler scratch.
    try:
        vmem_cap = int(pltpu.get_tpu_info().vmem_capacity_bytes)
    except Exception:
        vmem_cap = 64 * 1024 * 1024
    vmem_limit = min((vmem_cap * 3) // 4, 96 * 1024 * 1024)
    data_budget = (vmem_limit * 8) // 10

    # Per-row bytes: 2 inputs x 2 pipeline buffers (native dtype) plus ~3 f32
    # temporaries (shifted, exp, t32) the compiler materializes.
    bytes_per_row = 2 * c_block * (x_item + t_item) + 3 * c_block * 4
    budget_rows = max(mult, ((data_budget // bytes_per_row) // mult) * mult)

    n_rounded = pl.cdiv(N, mult) * mult
    # Keep at least 2 tiles when the batch allows it so both v7x TensorCores get work.
    half_rows = pl.cdiv(pl.cdiv(N, 2), mult) * mult
    tile_n = max(mult, min(budget_rows, n_rounded, half_rows))
    # TODO(synk): for vocab-sized C where even one mult-row tile exceeds VMEM, add a
    # second grid axis over C with an online (flash-style) running max / logsumexp.

    num_tiles = pl.cdiv(N, tile_n)
    needs_row_mask = (N % tile_n) != 0

    kernel = functools.partial(
        _soft_ce_kernel, n_rows=N, n_classes=C, tile_n=tile_n,
        needs_row_mask=needs_row_mask, needs_lane_mask=needs_lane_mask,
        assume_normalized_targets=assume_normalized_targets)

    partials = pl.pallas_call(
        kernel,
        out_shape=jax.ShapeDtypeStruct((num_tiles, 8, 128), jnp.float32),
        grid_spec=pltpu.PrefetchScalarGridSpec(
            num_scalar_prefetch=0,
            grid=(num_tiles,),
            in_specs=[
                pl.BlockSpec((tile_n, c_block), lambda i: (i, 0)),
                pl.BlockSpec((tile_n, c_block), lambda i: (i, 0)),
            ],
            out_specs=pl.BlockSpec((1, 8, 128), lambda i: (i, 0, 0)),
        ),
        compiler_params=pltpu.CompilerParams(
            dimension_semantics=("parallel",),   # independent tiles -> megacore-friendly
            vmem_limit_bytes=int(vmem_limit),
        ),
    )(x, target)

    # Tiny final reduction over per-tile partial sums, then the batch mean.
    return jnp.sum(partials[:, 0, 0]) / jnp.float32(N)


def _reference(x, target):
    x32 = x.astype(jnp.float32)
    t32 = target.astype(jnp.float32)
    return jnp.mean(jnp.sum(-t32 * jax.nn.log_softmax(x32, axis=-1), axis=-1))


if __name__ == "__main__":
    key = jax.random.PRNGKey(0)
    k_x, k_t, k_x2, k_t2 = jax.random.split(key, 4)

    # Test 1: f32, lane-friendly class count, N not a single tile (exercises multi-tile).
    N, C = 16, 128
    x = jax.random.normal(k_x, (N, C), dtype=jnp.float32)
    target = jax.nn.softmax(jax.random.normal(k_t, (N, C), dtype=jnp.float32), axis=-1)

    loss = jax.block_until_ready(jax.jit(soft_target_cross_entropy)(x, target))
    ref = _reference(x, target)
    assert jnp.allclose(loss, ref, rtol=1e-5, atol=1e-5), (loss, ref)

    # Test 2: bf16 inputs with a ragged batch (exercises lazy casts + per-row masking).
    N2, C2 = 10, 128
    x2 = jax.random.normal(k_x2, (N2, C2), dtype=jnp.float32).astype(jnp.bfloat16)
    t2 = jax.nn.softmax(jax.random.normal(k_t2, (N2, C2), dtype=jnp.float32),
                        axis=-1).astype(jnp.bfloat16)

    loss2 = jax.block_until_ready(jax.jit(soft_target_cross_entropy)(x2, t2))
    ref2 = _reference(x2, t2)
    assert jnp.allclose(loss2, ref2, rtol=1e-4, atol=1e-4), (loss2, ref2)

    print("KERNEL_OK")
</pallas_src>

<mosaic_0001>
module attributes {stable_mosaic.version = 11 : i64} {
  func.func @_soft_ce_kernel(%arg0: i32, %arg1: memref<8x128xf32, #tpu.memory_space<vmem>>, %arg2: memref<8x128xf32, #tpu.memory_space<vmem>>, %arg3: memref<1x8x128xf32, #tpu.memory_space<vmem>>) attributes {dimension_semantics = [#tpu.dimension_semantics<parallel>], iteration_bounds = array<i64: 2>, scalar_prefetch = 0 : i64, scratch_operands = 0 : i64, tpu.core_type = #tpu.core_type<tc>, window_params = [{transform_indices = @transform_0, window_bounds = array<i64: 8, 128>}, {transform_indices = @transform_1, window_bounds = array<i64: 8, 128>}, {transform_indices = @transform_2, window_bounds = array<i64: 1, 8, 128>}]} {
    %c0 = arith.constant 0 : index
    %c0_0 = arith.constant 0 : index
    %0 = vector.load %arg1[%c0, %c0_0] : memref<8x128xf32, #tpu.memory_space<vmem>>, vector<8x128xf32>
    %c0_1 = arith.constant 0 : index
    %c0_2 = arith.constant 0 : index
    %1 = vector.load %arg2[%c0_1, %c0_2] : memref<8x128xf32, #tpu.memory_space<vmem>>, vector<8x128xf32>
    %cst = arith.constant dense<0xFF800000> : vector<8xf32>
    %2 = vector.multi_reduction <maximumf>, %0, %cst [1] : vector<8x128xf32> to vector<8xf32>
    %3 = vector.shape_cast %2 : vector<8xf32> to vector<8x1xf32>
    %4 = vector.broadcast %3 : vector<8x1xf32> to vector<8x128xf32>
    %5 = arith.subf %0, %4 : vector<8x128xf32>
    %6 = math.exp %5 : vector<8x128xf32>
    %cst_3 = arith.constant dense<0.000000e+00> : vector<8xf32>
    %7 = vector.multi_reduction <add>, %6, %cst_3 [1] : vector<8x128xf32> to vector<8xf32>
    %8 = vector.shape_cast %7 : vector<8xf32> to vector<8x1xf32>
    %9 = math.log %8 : vector<8x1xf32>
    %10 = arith.mulf %1, %5 : vector<8x128xf32>
    %cst_4 = arith.constant dense<0.000000e+00> : vector<8xf32>
    %11 = vector.multi_reduction <add>, %10, %cst_4 [1] : vector<8x128xf32> to vector<8xf32>
    %12 = vector.shape_cast %11 : vector<8xf32> to vector<8x1xf32>
    %cst_5 = arith.constant dense<0.000000e+00> : vector<8xf32>
    %13 = vector.multi_reduction <add>, %1, %cst_5 [1] : vector<8x128xf32> to vector<8xf32>
    %14 = vector.shape_cast %13 : vector<8xf32> to vector<8x1xf32>
    %15 = arith.mulf %14, %9 : vector<8x1xf32>
    %16 = arith.subf %15, %12 : vector<8x1xf32>
    %17 = vector.shape_cast %16 : vector<8x1xf32> to vector<1x8x1xf32>
    %cst_6 = arith.constant dense<0.000000e+00> : vector<1xf32>
    %18 = vector.multi_reduction <add>, %17, %cst_6 [1, 2] : vector<1x8x1xf32> to vector<1xf32>
    %19 = vector.shape_cast %18 : vector<1xf32> to vector<1x1x1xf32>
    %20 = vector.extract %19[0, 0, 0] : f32 from vector<1x1x1xf32>
    %21 = vector.broadcast %20 : f32 to vector<1x8x128xf32>
    %c0_7 = arith.constant 0 : index
    %c0_8 = arith.constant 0 : index
    %c0_9 = arith.constant 0 : index
    %22 = vector.load %arg3[%c0_7, %c0_8, %c0_9] : memref<1x8x128xf32, #tpu.memory_space<vmem>>, vector<1x8x128xf32>
    tpu.vector_store %arg3[%c0_7, %c0_8, %c0_9], %21 {strides = array<i32>} : memref<1x8x128xf32, #tpu.memory_space<vmem>>, vector<1x8x128xf32>,
    return
  }
  func.func @transform_0(%arg0: i32) -> (i32, i32) {
    %c0_i32 = arith.constant 0 : i32
    %c0_i32_0 = arith.constant 0 : i32
    return %arg0, %c0_i32 : i32, i32
  }
  func.func @transform_1(%arg0: i32) -> (i32, i32) {
    %c0_i32 = arith.constant 0 : i32
    %c0_i32_0 = arith.constant 0 : i32
    return %arg0, %c0_i32 : i32, i32
  }
  func.func @transform_2(%arg0: i32) -> (i32, i32, i32) {
    %c0_i32 = arith.constant 0 : i32
    %c0_i32_0 = arith.constant 0 : i32
    %c0_i32_1 = arith.constant 0 : i32
    return %arg0, %c0_i32, %c0_i32_0 : i32, i32, i32
  }
}

</mosaic_0001>

<llo_original>
// kernel: soft_target_cross_entropy.1
$region0: #{soft_target_cross_entropy.1}
  #allocation0 [shape = 'u32[]', space=smem, size = 0x4, offset = 0x4, fixed_abs, tag = 'smem constant byte address 0x4 - core index']
  #allocation1 [shape = 'u32[72,128]{1,0:T(1,128)}', space=vmem, size = 0x9000, scoped, tag = 'internal scratch']
  %s0 = inlined_call_operand.hbm [shape: f32[16,128], index: 0, kind: input, shape index: {}]
  %s1 = inlined_call_operand.hbm [shape: f32[16,128], index: 1, kind: input, shape index: {}]
  %s2 = inlined_call_operand.vmem [shape: f32[2,8,128], index: 2, kind: output, shape index: {}]
  %s3 = sld [smem:[#allocation0]]
  $region49: #{soft_target_cross_entropy.1} parent=0
    _
  %s5 = ssub.s32 1, %s3
  %s6 = scalar_select 0, %s5, %s3
  $region1: #{soft_target_cross_entropy.1} parent=0
    #allocation2 [shape = 'u8[8192]{0}', space=vmem, size = 0x2000, scoped, tag = 'input window, operand 0']
    #allocation3 [shape = 's32[2]{0}', space=sflag, size = 0x8, scoped, tag = 'scoped memory for soft_target_cross_entropy.1']
    #allocation4 [shape = 'u8[8192]{0}', space=vmem, size = 0x2000, scoped, tag = 'input window, operand 1']
    #allocation5 [shape = 's32[2]{0}', space=sflag, size = 0x8, scoped, tag = 'scoped memory for soft_target_cross_entropy.1']
    %7 = vsyncpa [#allocation3], 0
    %s8 = scalar_lea.sflag [#allocation3], 1
    %9 = vsyncpa %s8, 0
    %10 = vsyncpa [#allocation5], 0
    %s11 = scalar_lea.sflag [#allocation5], 1
    %12 = vsyncpa %s11, 0
    loop: start=0, step=1, limit=4
    $region2: #{soft_target_cross_entropy.1} parent=1 // loop_pre_header
      _
    $region3: #{soft_target_cross_entropy.1} parent=1 // loop_header
      %s14 = sphi 0, %s18
      %p15 = scmp.ge.s32.totalorder %s14, 4
      %s24 = sphi 0, %s26
      %s27 = sphi 0, %s24
      %s28 = sphi 0, %s27
      %s44 = sphi 0, %s28
      %s50 = sphi 0, %s52
      %s53 = sphi 0, %s50
      %s54 = sphi 0, %s53
      %s70 = sphi 0, %s54
      %s76 = sphi 0, %s78
      %s79 = sphi 0, %s76
      %s80 = sphi 0, %s79
      %s96 = sphi 0, %s80
    $region4: #{soft_target_cross_entropy.1} parent=1 // loop_header_branch
      %17 = sbr.rel (%p15) target = $region8
    $region5: #{soft_target_cross_entropy.1} parent=1 // loop_body
      %s19 = ssub.s32 %s14, 1
      %s20 = ssub.s32 %s14, 2
      %s21 = sadd.s32 %s14, 1
      %s22 = ssub.s32 %s14, %s21
      %p23 = scmp.eq.s32.totalorder %s22, 0
      %s25 = sadd.s32 %s24, 1
      %s26 = scalar_select %p23, %s24, %s25
      %p29 = pneg %p23
      %p30 = scmp.eq.s32.totalorder %s14, 1
      %p31 = por %p29, %p30
      %p32 = scmp.ne.s32.totalorder %s24, %s27
      %p33 = scmp.eq.s32.totalorder %s14, 0
      %p34 = por %p32, %p33
      %p35 = scmp.ne.s32.totalorder %s24, %s27
      %p36 = scmp.eq.s32.totalorder %s19, 1
      %p37 = por %p35, %p36
      %p38 = scmp.ne.s32.totalorder %s27, %s28
      %p39 = scmp.eq.s32.totalorder %s19, 0
      %p40 = por %p38, %p39
      %p41 = scmp.ne.s32.totalorder %s27, %s28
      %p42 = scmp.eq.s32.totalorder %s20, 1
      %p43 = por %p41, %p42
      %p45 = scmp.ne.s32.totalorder %s28, %s44
      %p46 = scmp.eq.s32.totalorder %s20, 0
      %p47 = por %p45, %p46
      %s48 = ssub.s32 %s14, %s21
      %p49 = scmp.eq.s32.totalorder %s48, 0
      %s51 = sadd.s32 %s50, 1
      %s52 = scalar_select %p49, %s50, %s51
      %p55 = pneg %p49
      %p56 = scmp.eq.s32.totalorder %s14, 1
      %p57 = por %p55, %p56
      %p58 = scmp.ne.s32.totalorder %s50, %s53
      %p59 = scmp.eq.s32.totalorder %s14, 0
      %p60 = por %p58, %p59
      %p61 = scmp.ne.s32.totalorder %s50, %s53
      %p62 = scmp.eq.s32.totalorder %s19, 1
      %p63 = por %p61, %p62
      %p64 = scmp.ne.s32.totalorder %s53, %s54
      %p65 = scmp.eq.s32.totalorder %s19, 0
      %p66 = por %p64, %p65
      %p67 = scmp.ne.s32.totalorder %s53, %s54
      %p68 = scmp.eq.s32.totalorder %s20, 1
      %p69 = por %p67, %p68
      %p71 = scmp.ne.s32.totalorder %s54, %s70
      %p72 = scmp.eq.s32.totalorder %s20, 0
      %p73 = por %p71, %p72
      %s74 = ssub.s32 %s14, %s21
      %p75 = scmp.eq.s32.totalorder %s74, 0
      %s77 = sadd.s32 %s76, 1
      %s78 = scalar_select %p75, %s76, %s77
      %p81 = pneg %p75
      %p82 = scmp.eq.s32.totalorder %s14, 1
      %p83 = por %p81, %p82
      %p84 = scmp.ne.s32.totalorder %s76, %s79
      %p85 = scmp.eq.s32.totalorder %s14, 0
      %p86 = por %p84, %p85
      %p87 = scmp.ne.s32.totalorder %s76, %s79
      %p88 = scmp.eq.s32.totalorder %s19, 1
      %p89 = por %p87, %p88
      %p90 = scmp.ne.s32.totalorder %s79, %s80
      %p91 = scmp.eq.s32.totalorder %s19, 0
      %p92 = por %p90, %p91
      %p93 = scmp.ne.s32.totalorder %s79, %s80
      %p94 = scmp.eq.s32.totalorder %s20, 1
      %p95 = por %p93, %p94
      %p97 = scmp.ne.s32.totalorder %s80, %s96
      %p98 = scmp.eq.s32.totalorder %s20, 0
      %p99 = por %p97, %p98
      %p100 = scmp.le.s32.totalorder 1, %s14
      %p101 = scmp.lt.s32.totalorder %s14, 3
      %p102 = pnand %p100, %p101
      %p103 = pneg %p102
      // Predicated region
      $region9: #{soft_target_cross_entropy.1} parent=5 // pred_check
        _
      $region10: #{soft_target_cross_entropy.1} parent=5 // pred_check_branch
        %105 = sbr.rel (%p102) target = $region12
      $region11: #{soft_target_cross_entropy.1} parent=5 // pred_region
        %s106 = ssub.s32 %s14, 1
      $region12: #{soft_target_cross_entropy.1} parent=5 // pred_fallthru
        _
      %p107 = scmp.lt.s32.totalorder %s14, 2
      // Predicated region
      $region13: #{soft_target_cross_entropy.1} parent=5 // pred_check
        %p108 = pneg %p107
      $region14: #{soft_target_cross_entropy.1} parent=5 // pred_check_branch
        %110 = sbr.rel (%p108) target = $region16
      $region15: #{soft_target_cross_entropy.1} parent=5 // pred_region
        // Predicated region
        $region17: #{soft_target_cross_entropy.1} parent=15 // pred_check
          %p111 = pneg %p34
        $region18: #{soft_target_cross_entropy.1} parent=15 // pred_check_branch
          %113 = sbr.rel (%p111) target = $region20
        $region19: #{soft_target_cross_entropy.1} parent=15 // pred_region
          %s114 = sand.u32 %s24, 1
          %s115 = scalar_lea.sflag [#allocation3], %s114
          %s116 = sand.u32 %s24, 1
          %s117 = smul.addr %s116, 8
          %s118 = scalar_lea.vmem [#allocation2], %s117
          %120 = vsyncadd %s115, 0
          %s121 = smul.addr %s14, 8
          %s122 = scalar_lea.hbm %s0, %s121
          %s124 = sshll.u32 %s122, 4
          %s125 = int_to_ptr.hbm [resolvable:$true] %s124
          %s126 = sshll.u32 %s118, 4
          %s127 = int_to_ptr.vmem [resolvable:$true] %s126
          %129 = dma.hbm_to_vmem [thread:$0]  %s125, 128, %s127, %s115
        $region20: #{soft_target_cross_entropy.1} parent=15 // pred_fallthru
          _
        // Predicated region
        $region21: #{soft_target_cross_entropy.1} parent=15 // pred_check
          %p130 = pneg %p60
        $region22: #{soft_target_cross_entropy.1} parent=15 // pred_check_branch
          %132 = sbr.rel (%p130) target = $region24
        $region23: #{soft_target_cross_entropy.1} parent=15 // pred_region
          %s133 = sand.u32 %s50, 1
          %s134 = scalar_lea.sflag [#allocation5], %s133
          %s135 = sand.u32 %s50, 1
          %s136 = smul.addr %s135, 8
          %s137 = scalar_lea.vmem [#allocation4], %s136
          %139 = vsyncadd %s134, 0
          %s140 = smul.addr %s14, 8
          %s141 = scalar_lea.hbm %s1, %s140
          %s143 = sshll.u32 %s141, 4
          %s144 = int_to_ptr.hbm [resolvable:$true] %s143
          %s145 = sshll.u32 %s137, 4
          %s146 = int_to_ptr.vmem [resolvable:$true] %s145
          %148 = dma.hbm_to_vmem [thread:$0]  %s144, 128, %s146, %s134
        $region24: #{soft_target_cross_entropy.1} parent=15 // pred_fallthru
          _
      $region16: #{soft_target_cross_entropy.1} parent=5 // pred_fallthru
        _
      %p149 = scmp.le.s32.totalorder 1, %s14
      %p150 = scmp.lt.s32.totalorder %s14, 3
      %p151 = pnand %p149, %p150
      %p152 = pneg %p151
      // Predicated region
      $region25: #{soft_target_cross_entropy.1} parent=5 // pred_check
        _
      $region26: #{soft_target_cross_entropy.1} parent=5 // pred_check_branch
        %154 = sbr.rel (%p151) target = $region28
      $region27: #{soft_target_cross_entropy.1} parent=5 // pred_region
        %s155 = ssub.s32 %s14, 1
        %s156 = sand.u32 %s27, 1
        %s157 = scalar_lea.sflag [#allocation3], %s156
        %s158 = sand.u32 %s27, 1
        %s159 = smul.addr %s158, 8
        %s160 = scalar_lea.vmem [#allocation2], %s159
        // Predicated region
        $region29: #{soft_target_cross_entropy.1} parent=27 // pred_check
          %p161 = pneg %p40
        $region30: #{soft_target_cross_entropy.1} parent=27 // pred_check_branch
          %163 = sbr.rel (%p161) target = $region32
        $region31: #{soft_target_cross_entropy.1} parent=27 // pred_region
          %165 = dma.done %s157, 128
        $region32: #{soft_target_cross_entropy.1} parent=27 // pred_fallthru
          _
        %s166 = sand.u32 %s53, 1
        %s167 = scalar_lea.sflag [#allocation5], %s166
        %s168 = sand.u32 %s53, 1
        %s169 = smul.addr %s168, 8
        %s170 = scalar_lea.vmem [#allocation4], %s169
        // Predicated region
        $region33: #{soft_target_cross_entropy.1} parent=27 // pred_check
          %p171 = pneg %p66
        $region34: #{soft_target_cross_entropy.1} parent=27 // pred_check_branch
          %173 = sbr.rel (%p171) target = $region36
        $region35: #{soft_target_cross_entropy.1} parent=27 // pred_region
          %175 = dma.done %s167, 128
        $region36: #{soft_target_cross_entropy.1} parent=27 // pred_fallthru
          _
        %s176 = sand.u32 %s27, 1
        %s177 = scalar_lea.sflag [#allocation3], %s176
        %s178 = sand.u32 %s27, 1
        %s179 = smul.addr %s178, 8
        %s180 = scalar_lea.vmem [#allocation2], %s179
        %p181 = pneg %p40
        %p182 = pneg %p37
        %s183 = sand.u32 %s53, 1
        %s184 = scalar_lea.sflag [#allocation5], %s183
        %s185 = sand.u32 %s53, 1
        %s186 = smul.addr %s185, 8
        %s187 = scalar_lea.vmem [#allocation4], %s186
        %p188 = pneg %p66
        %p189 = pneg %p63
        %p190 = pneg %p92
        %p191 = pneg %p89
        %p192 = scmp.lt.s32.totalorder %s19, 1
        %s193 = scalar_select %p192, %s19, 1
        %s194 = smul.addr %s193, 8
        %s195 = scalar_lea.vmem %s2, %s194
        %p196 = scmp.lt.s32.totalorder %s19, 1
        %s197 = scalar_select %p196, %s19, 1
        %s198 = smul.addr %s197, 8
        %s199 = scalar_lea.vmem %s2, %s198
        %v200 = vld [vmem:[%s160] sm:$0xff]
        %v201 = vld [vmem:[%s170] sm:$0xff]
        %202 = vmax.xlane.f32.xlu0 %v200
        %v203 = vpop.xlane.xlu0 %202
        %v204 = vsub.f32 %v200, %v203
        %v205 = vmul.f32 %v204, 1.442695
        %v206 = vpow.pop %v205
        %207 = vadd.xlane.f32.xlu0 %v206
        %v208 = vpop.xlane.xlu0 %207
        %v209 = vlog2.pop %v208
        %v210 = vmul.f32 %v209, 0.6931472
        %v211 = vmul.f32 %v201, %v204
        %212 = vadd.xlane.f32.xlu0 %v211
        %v213 = vpop.xlane.xlu0 %212
        %214 = vadd.xlane.f32.xlu0 %v201
        %v215 = vpop.xlane.xlu0 %214
        %v216 = vmul.f32 %v215, %v210
        %v217 = vsub.f32 %v216, %v213
        %vm218 = vcmask 7168
        %v219 = vsel %vm218, %v217, 0.0
        %220 = vadd.xlane.f32.xlu0 %v219
        %v221 = vpop.xlane.xlu0 %220
        %v222 = vrot.slane %v221, 4
        %v223 = vadd.f32 %v221, %v222
        %v224 = vrot.slane %v223, 2
        %v225 = vadd.f32 %v223, %v224
        %v226 = vrot.slane %v225, 1
        %v227 = vadd.f32 %v225, %v226
        %s228 = vtos %v227
        %v229 = vstv %s228
        %230 = vst [vmem:[%s199] sm:$0xff] %v229
        %p231 = scmp.lt.s32.totalorder %s19, 1
        %s232 = scalar_select %p231, %s19, 1
        %s233 = smul.addr %s232, 8
        %s234 = scalar_lea.vmem %s2, %s233
        // Predicated region
        $region37: #{soft_target_cross_entropy.1} parent=27 // pred_check
          %p235 = pneg %p89
        $region38: #{soft_target_cross_entropy.1} parent=27 // pred_check_branch
          %237 = sbr.rel (%p235) target = $region40
        $region39: #{soft_target_cross_entropy.1} parent=27 // pred_region
          _
        $region40: #{soft_target_cross_entropy.1} parent=27 // pred_fallthru
          _
      $region28: #{soft_target_cross_entropy.1} parent=5 // pred_fallthru
        _
      %p238 = scmp.le.s32.totalorder 2, %s14
      // Predicated region
      $region41: #{soft_target_cross_entropy.1} parent=5 // pred_check
        %p239 = pneg %p238
      $region42: #{soft_target_cross_entropy.1} parent=5 // pred_check_branch
        %241 = sbr.rel (%p239) target = $region44
      $region43: #{soft_target_cross_entropy.1} parent=5 // pred_region
        %s242 = ssub.s32 %s14, 2
        // Predicated region
        $region45: #{soft_target_cross_entropy.1} parent=43 // pred_check
          %p243 = pneg %p95
        $region46: #{soft_target_cross_entropy.1} parent=43 // pred_check_branch
          %245 = sbr.rel (%p243) target = $region48
        $region47: #{soft_target_cross_entropy.1} parent=43 // pred_region
          %p246 = scmp.lt.s32.totalorder %s20, 1
          %s247 = scalar_select %p246, %s20, 1
          %s248 = smul.addr %s247, 8
          %s249 = scalar_lea.vmem %s2, %s248
        $region48: #{soft_target_cross_entropy.1} parent=43 // pred_fallthru
          _
      $region44: #{soft_target_cross_entropy.1} parent=5 // pred_fallthru
        _
    $region6: #{soft_target_cross_entropy.1} parent=1 // loop_footer
      %s18 = sadd.s32 1, %s14
    $region7: #{soft_target_cross_entropy.1} parent=1 // loop_footer_branch
      %13 = sbr.rel target = $region3
    $region8: #{soft_target_cross_entropy.1} parent=1 // loop_exit
      _
    %250 = vsyncpa [#allocation3], 1
    %s251 = scalar_lea.sflag [#allocation3], 1
    %252 = vsyncpa %s251, 1
    %253 = vsyncpa [#allocation5], 1
    %s254 = scalar_lea.sflag [#allocation5], 1
    %255 = vsyncpa %s254, 1

</llo_original>
